<compile_context>
chip_gen: v7x
topology: tpu7x:2x2x1
jax: 0.10.0
libtpu: 0.0.40
codegen_flags: <defaults>
</compile_context>

<pallas_src>
import jax
import jax.numpy as jnp
from jax.experimental import pallas as pl
from jax.experimental.pallas import tpu as pltpu

GRU_DIM = 16
FC_DIM = 32
IN_DIM = 3 * GRU_DIM        # 48
OUT_DIM = 2 * FC_DIM        # 64  ([mu | logvar] fused)
BN_EPS = 1e-5

# Packed-weight row layout (all weights stored pre-transposed: (in, out)).
_W1_R0, _W1_R1 = 0, IN_DIM                                # w1: (48, 32)
_W2_R0, _W2_R1 = IN_DIM, IN_DIM + FC_DIM                  # w2: (32, 32)
_WH_R0, _WH_R1 = IN_DIM + FC_DIM, IN_DIM + 2 * FC_DIM     # [wmu|wlv]: (32, 64)
_WPACK_ROWS = IN_DIM + 2 * FC_DIM                         # 112
# Packed-vector row layout (padded to 8 rows for sublane alignment).
_G1, _BE1, _G2, _BE2, _BH = 0, 1, 2, 3, 4
_VPACK_ROWS = 8


def _bn_tanh(h, gamma, beta):
    # Train-mode BatchNorm1d folded to one per-feature scale/shift, then tanh.
    mean = jnp.mean(h, axis=0, keepdims=True)
    var = jnp.mean((h - mean) ** 2, axis=0, keepdims=True)
    scale = gamma * jax.lax.rsqrt(var + BN_EPS)
    shift = beta - mean * scale
    return jnp.tanh(h * scale + shift)


def recognition_kernel(x_ref, wpack_ref, vpack_ref, out_ref):
    x = x_ref[...].astype(jnp.float32)

    # Static slices of the two packed parameter blocks (sublane-aligned rows).
    w1 = wpack_ref[_W1_R0:_W1_R1, 0:FC_DIM]
    w2 = wpack_ref[_W2_R0:_W2_R1, 0:FC_DIM]
    wh = wpack_ref[_WH_R0:_WH_R1, 0:OUT_DIM]

    g1 = vpack_ref[_G1:_G1 + 1, 0:FC_DIM]
    be1 = vpack_ref[_BE1:_BE1 + 1, 0:FC_DIM]
    g2 = vpack_ref[_G2:_G2 + 1, 0:FC_DIM]
    be2 = vpack_ref[_BE2:_BE2 + 1, 0:FC_DIM]
    bh = vpack_ref[_BH:_BH + 1, 0:OUT_DIM]

    # Layer 1: Linear (bias exactly cancelled by BN mean-sub) + BN + tanh.
    h = jnp.dot(x, w1, preferred_element_type=jnp.float32)
    h = _bn_tanh(h, g1, be1)

    # Layer 2.
    h = jnp.dot(h, w2, preferred_element_type=jnp.float32)
    h = _bn_tanh(h, g2, be2)

    # Fused heads: single (B, 64) matmul = [mu | logvar].
    out = jnp.dot(h, wh, preferred_element_type=jnp.float32) + bh
    out_ref[...] = out.astype(out_ref.dtype)


def recognition_net(x, wpack, vpack):
    # TODO(synk): if B ever grows large, tile the batch over a grid with a
    # two-pass BatchNorm (per-tile sum / sum-of-squares accumulation) instead of
    # one full-batch VMEM block.
    B = x.shape[0]
    vmem = pltpu.MemorySpace.VMEM
    out = pl.pallas_call(
        recognition_kernel,
        out_shape=jax.ShapeDtypeStruct((B, OUT_DIM), jnp.float32),
        in_specs=[
            pl.BlockSpec(memory_space=vmem),
            pl.BlockSpec(memory_space=vmem),
            pl.BlockSpec(memory_space=vmem),
        ],
        out_specs=pl.BlockSpec(memory_space=vmem),
    )(x, wpack, vpack)
    return out[:, :FC_DIM], out[:, FC_DIM:]


def init_params(key):
    ks = jax.random.split(key, 8)

    def linear(kw, kb, fan_in, fan_out):
        bound = 1.0 / jnp.sqrt(fan_in)
        w = jax.random.uniform(kw, (fan_in, fan_out), jnp.float32, -bound, bound)
        b = jax.random.uniform(kb, (1, fan_out), jnp.float32, -bound, bound)
        return w, b

    w1, b1 = linear(ks[0], ks[1], IN_DIM, FC_DIM)
    w2, b2 = linear(ks[2], ks[3], FC_DIM, FC_DIM)
    wmu, bmu = linear(ks[4], ks[5], FC_DIM, FC_DIM)
    wlv, blv = linear(ks[6], ks[7], FC_DIM, FC_DIM)

    ones = jnp.ones((1, FC_DIM), jnp.float32)
    zeros = jnp.zeros((1, FC_DIM), jnp.float32)

    return dict(
        w1=w1, b1=b1, g1=ones, be1=zeros,
        w2=w2, b2=b2, g2=ones, be2=zeros,
        wmu=wmu, bmu=bmu,
        wlv=wlv, blv=blv,
    )


def pack_params(p):
    """Pack all kernel-side parameters into two contiguous f32 arrays."""
    wpack = jnp.zeros((_WPACK_ROWS, OUT_DIM), jnp.float32)
    wpack = wpack.at[_W1_R0:_W1_R1, 0:FC_DIM].set(p["w1"])
    wpack = wpack.at[_W2_R0:_W2_R1, 0:FC_DIM].set(p["w2"])
    wpack = wpack.at[_WH_R0:_WH_R1, 0:OUT_DIM].set(
        jnp.concatenate([p["wmu"], p["wlv"]], axis=1))

    vpack = jnp.zeros((_VPACK_ROWS, OUT_DIM), jnp.float32)
    vpack = vpack.at[_G1, 0:FC_DIM].set(p["g1"][0])
    vpack = vpack.at[_BE1, 0:FC_DIM].set(p["be1"][0])
    vpack = vpack.at[_G2, 0:FC_DIM].set(p["g2"][0])
    vpack = vpack.at[_BE2, 0:FC_DIM].set(p["be2"][0])
    vpack = vpack.at[_BH, 0:OUT_DIM].set(
        jnp.concatenate([p["bmu"][0], p["blv"][0]]))
    return wpack, vpack


def _reference(x, p):
    # Pure-JAX reference matching PyTorch train-mode forward (biases included).
    def bn(h, g, b):
        m = jnp.mean(h, axis=0, keepdims=True)
        v = jnp.mean((h - m) ** 2, axis=0, keepdims=True)
        return (h - m) / jnp.sqrt(v + BN_EPS) * g + b

    h = jnp.tanh(bn(x @ p["w1"] + p["b1"], p["g1"], p["be1"]))
    h = jnp.tanh(bn(h @ p["w2"] + p["b2"], p["g2"], p["be2"]))
    return h @ p["wmu"] + p["bmu"], h @ p["wlv"] + p["blv"]


if __name__ == "__main__":
    key = jax.random.PRNGKey(0)
    kx, kp = jax.random.split(key)

    B = 8
    x = jax.random.normal(kx, (B, IN_DIM), jnp.float32)
    params = init_params(kp)
    wpack, vpack = pack_params(params)

    mu, logvar = recognition_net(x, wpack, vpack)
    jax.block_until_ready((mu, logvar))

    mu_ref, lv_ref = _reference(x, params)
    assert mu.shape == (B, FC_DIM) and logvar.shape == (B, FC_DIM)
    assert jnp.allclose(mu, mu_ref, atol=1e-4, rtol=1e-4)
    assert jnp.allclose(logvar, lv_ref, atol=1e-4, rtol=1e-4)

    print("KERNEL_OK")
</pallas_src>

<mosaic_0001>
module attributes {stable_mosaic.version = 11 : i64} {
  func.func @recognition_kernel(%arg0: memref<8x48xf32, #tpu.memory_space<vmem>>, %arg1: memref<112x64xf32, #tpu.memory_space<vmem>>, %arg2: memref<8x64xf32, #tpu.memory_space<vmem>>, %arg3: memref<8x64xf32, #tpu.memory_space<vmem>>) attributes {dimension_semantics = [], scalar_prefetch = 0 : i64, scratch_operands = 0 : i64, tpu.core_type = #tpu.core_type<tc>} {
    %c0 = arith.constant 0 : index
    %c0_0 = arith.constant 0 : index
    %0 = vector.load %arg0[%c0, %c0_0] : memref<8x48xf32, #tpu.memory_space<vmem>>, vector<8x48xf32>
    %c0_1 = arith.constant 0 : index
    %c0_2 = arith.constant 0 : index
    %1 = vector.load %arg1[%c0_1, %c0_2] : memref<112x64xf32, #tpu.memory_space<vmem>>, vector<48x32xf32>
    %c48 = arith.constant 48 : index
    %c0_3 = arith.constant 0 : index
    %2 = vector.load %arg1[%c48, %c0_3] : memref<112x64xf32, #tpu.memory_space<vmem>>, vector<32x32xf32>
    %c80 = arith.constant 80 : index
    %c0_4 = arith.constant 0 : index
    %3 = vector.load %arg1[%c80, %c0_4] : memref<112x64xf32, #tpu.memory_space<vmem>>, vector<32x64xf32>
    %c0_5 = arith.constant 0 : index
    %c0_6 = arith.constant 0 : index
    %4 = vector.load %arg2[%c0_5, %c0_6] : memref<8x64xf32, #tpu.memory_space<vmem>>, vector<1x32xf32>
    %c1 = arith.constant 1 : index
    %c0_7 = arith.constant 0 : index
    %5 = vector.load %arg2[%c1, %c0_7] : memref<8x64xf32, #tpu.memory_space<vmem>>, vector<1x32xf32>
    %c2 = arith.constant 2 : index
    %c0_8 = arith.constant 0 : index
    %6 = vector.load %arg2[%c2, %c0_8] : memref<8x64xf32, #tpu.memory_space<vmem>>, vector<1x32xf32>
    %c3 = arith.constant 3 : index
    %c0_9 = arith.constant 0 : index
    %7 = vector.load %arg2[%c3, %c0_9] : memref<8x64xf32, #tpu.memory_space<vmem>>, vector<1x32xf32>
    %c4 = arith.constant 4 : index
    %c0_10 = arith.constant 0 : index
    %8 = vector.load %arg2[%c4, %c0_10] : memref<8x64xf32, #tpu.memory_space<vmem>>, vector<1x64xf32>
    %cst = arith.constant dense<0.000000e+00> : vector<8x32xf32>
    %9 = tpu.matmul %0, %1, %cst {dimension_numbers = #tpu.dot_dimension_numbers<[1], [0], [0], [1], [0, 0, 1, 1], [], []>} : vector<8x48xf32>, vector<48x32xf32>, vector<8x32xf32> -> vector<8x32xf32>
    %cst_11 = arith.constant dense<0.000000e+00> : vector<32xf32>
    %10 = vector.multi_reduction <add>, %9, %cst_11 [0] : vector<8x32xf32> to vector<32xf32>
    %11 = vector.shape_cast %10 : vector<32xf32> to vector<1x32xf32>
    %cst_12 = arith.constant 8.000000e+00 : f32
    %12 = vector.broadcast %cst_12 : f32 to vector<1x32xf32>
    %13 = arith.divf %11, %12 : vector<1x32xf32>
    %14 = vector.broadcast %13 : vector<1x32xf32> to vector<8x32xf32>
    %15 = arith.subf %9, %14 : vector<8x32xf32>
    %16 = arith.mulf %15, %15 : vector<8x32xf32>
    %cst_13 = arith.constant dense<0.000000e+00> : vector<32xf32>
    %17 = vector.multi_reduction <add>, %16, %cst_13 [0] : vector<8x32xf32> to vector<32xf32>
    %18 = vector.shape_cast %17 : vector<32xf32> to vector<1x32xf32>
    %cst_14 = arith.constant 8.000000e+00 : f32
    %19 = vector.broadcast %cst_14 : f32 to vector<1x32xf32>
    %20 = arith.divf %18, %19 : vector<1x32xf32>
    %cst_15 = arith.constant 9.99999974E-6 : f32
    %21 = vector.broadcast %cst_15 : f32 to vector<1x32xf32>
    %22 = arith.addf %20, %21 : vector<1x32xf32>
    %23 = math.rsqrt %22 : vector<1x32xf32>
    %24 = arith.mulf %4, %23 : vector<1x32xf32>
    %25 = arith.mulf %13, %24 : vector<1x32xf32>
    %26 = arith.subf %5, %25 : vector<1x32xf32>
    %27 = vector.broadcast %24 : vector<1x32xf32> to vector<8x32xf32>
    %28 = arith.mulf %9, %27 : vector<8x32xf32>
    %29 = vector.broadcast %26 : vector<1x32xf32> to vector<8x32xf32>
    %30 = arith.addf %28, %29 : vector<8x32xf32>
    %31 = math.tanh %30 : vector<8x32xf32>
    %cst_16 = arith.constant dense<0.000000e+00> : vector<8x32xf32>
    %32 = tpu.matmul %31, %2, %cst_16 {dimension_numbers = #tpu.dot_dimension_numbers<[1], [0], [0], [1], [0, 0, 1, 1], [], []>} : vector<8x32xf32>, vector<32x32xf32>, vector<8x32xf32> -> vector<8x32xf32>
    %cst_17 = arith.constant dense<0.000000e+00> : vector<32xf32>
    %33 = vector.multi_reduction <add>, %32, %cst_17 [0] : vector<8x32xf32> to vector<32xf32>
    %34 = vector.shape_cast %33 : vector<32xf32> to vector<1x32xf32>
    %cst_18 = arith.constant 8.000000e+00 : f32
    %35 = vector.broadcast %cst_18 : f32 to vector<1x32xf32>
    %36 = arith.divf %34, %35 : vector<1x32xf32>
    %37 = vector.broadcast %36 : vector<1x32xf32> to vector<8x32xf32>
    %38 = arith.subf %32, %37 : vector<8x32xf32>
    %39 = arith.mulf %38, %38 : vector<8x32xf32>
    %cst_19 = arith.constant dense<0.000000e+00> : vector<32xf32>
    %40 = vector.multi_reduction <add>, %39, %cst_19 [0] : vector<8x32xf32> to vector<32xf32>
    %41 = vector.shape_cast %40 : vector<32xf32> to vector<1x32xf32>
    %cst_20 = arith.constant 8.000000e+00 : f32
    %42 = vector.broadcast %cst_20 : f32 to vector<1x32xf32>
    %43 = arith.divf %41, %42 : vector<1x32xf32>
    %cst_21 = arith.constant 9.99999974E-6 : f32
    %44 = vector.broadcast %cst_21 : f32 to vector<1x32xf32>
    %45 = arith.addf %43, %44 : vector<1x32xf32>
    %46 = math.rsqrt %45 : vector<1x32xf32>
    %47 = arith.mulf %6, %46 : vector<1x32xf32>
    %48 = arith.mulf %36, %47 : vector<1x32xf32>
    %49 = arith.subf %7, %48 : vector<1x32xf32>
    %50 = vector.broadcast %47 : vector<1x32xf32> to vector<8x32xf32>
    %51 = arith.mulf %32, %50 : vector<8x32xf32>
    %52 = vector.broadcast %49 : vector<1x32xf32> to vector<8x32xf32>
    %53 = arith.addf %51, %52 : vector<8x32xf32>
    %54 = math.tanh %53 : vector<8x32xf32>
    %cst_22 = arith.constant dense<0.000000e+00> : vector<8x64xf32>
    %55 = tpu.matmul %54, %3, %cst_22 {dimension_numbers = #tpu.dot_dimension_numbers<[1], [0], [0], [1], [0, 0, 1, 1], [], []>} : vector<8x32xf32>, vector<32x64xf32>, vector<8x64xf32> -> vector<8x64xf32>
    %56 = vector.broadcast %8 : vector<1x64xf32> to vector<8x64xf32>
    %57 = arith.addf %55, %56 : vector<8x64xf32>
    %c0_23 = arith.constant 0 : index
    %c0_24 = arith.constant 0 : index
    %58 = vector.load %arg3[%c0_23, %c0_24] : memref<8x64xf32, #tpu.memory_space<vmem>>, vector<8x64xf32>
    tpu.vector_store %arg3[%c0_23, %c0_24], %57 {strides = array<i32>} : memref<8x64xf32, #tpu.memory_space<vmem>>, vector<8x64xf32>,
    return
  }
}

</mosaic_0001>

<llo_original>
// kernel: tpu_custom_call.1
$region0: #{tpu_custom_call.1}
  #allocation0 [shape = 'u32[]', space=smem, size = 0x4, offset = 0x4, fixed_abs, tag = 'smem constant byte address 0x4 - core index']
  #allocation1 [shape = 'u32[144,128]{1,0:T(1,128)}', space=vmem, size = 0x12000, scoped, tag = 'internal scratch']
  %s0 = inlined_call_operand.vmem [shape: f32[8,48], index: 0, kind: input, shape index: {}]
  %s1 = inlined_call_operand.vmem [shape: f32[112,64], index: 1, kind: input, shape index: {}]
  %s2 = inlined_call_operand.vmem [shape: f32[8,64], index: 2, kind: input, shape index: {}]
  %s3 = inlined_call_operand.hbm [shape: f32[8,64], index: 3, kind: output, shape index: {}]
  %s4 = sld [smem:[#allocation0]]
  $region22: #{tpu_custom_call.1} parent=0
    _
  %s6 = ssub.s32 1, %s4
  %s7 = scalar_select 0, %s6, %s4
  $region1: #{tpu_custom_call.1} parent=0
    #allocation2 [shape = 'u8[4096]{0}', space=vmem, size = 0x1000, scoped, tag = 'output window, operand 0, single buffered']
    #allocation3 [shape = 's32[1]{0}', space=sflag, size = 0x4, scoped, tag = 'scoped memory for tpu_custom_call.1']
    %8 = vsyncpa [#allocation3], 0
    // Predicated region
    $region2: #{tpu_custom_call.1} parent=1 // pred_check
      _
    $region3: #{tpu_custom_call.1} parent=1 // pred_check_branch
      %10 = sbr.rel (0) target = $region5
    $region4: #{tpu_custom_call.1} parent=1 // pred_region
      _
    $region5: #{tpu_custom_call.1} parent=1 // pred_fallthru
      _
    // Predicated region
    $region6: #{tpu_custom_call.1} parent=1 // pred_check
      _
    $region7: #{tpu_custom_call.1} parent=1 // pred_check_branch
      %12 = sbr.rel (0) target = $region9
    $region8: #{tpu_custom_call.1} parent=1 // pred_region
      _
    $region9: #{tpu_custom_call.1} parent=1 // pred_fallthru
      _
    // Predicated region
    $region10: #{tpu_custom_call.1} parent=1 // pred_check
      _
    $region11: #{tpu_custom_call.1} parent=1 // pred_check_branch
      %14 = sbr.rel (0) target = $region13
    $region12: #{tpu_custom_call.1} parent=1 // pred_region
      _
    $region13: #{tpu_custom_call.1} parent=1 // pred_fallthru
      _
    %v15 = vld [vmem:[%s0] sm:$0xff]
    %v16 = vld [vmem:[%s1] sm:$0xff]
    %v17 = vld [vmem:[%s1 + $0x8] sm:$0xff]
    %v18 = vld [vmem:[%s1 + $0x10] sm:$0xff]
    %v19 = vld [vmem:[%s1 + $0x18] sm:$0xff]
    %v20 = vld [vmem:[%s1 + $0x20] sm:$0xff]
    %v21 = vld [vmem:[%s1 + $0x28] sm:$0xff]
    %v22 = vld [vmem:[%s1 + $0x30] sm:$0xff]
    %v23 = vld [vmem:[%s1 + $0x38] sm:$0xff]
    %v24 = vld [vmem:[%s1 + $0x40] sm:$0xff]
    %v25 = vld [vmem:[%s1 + $0x48] sm:$0xff]
    %v26 = vld [vmem:[%s1 + $0x50] sm:$0xff]
    %v27 = vld [vmem:[%s1 + $0x58] sm:$0xff]
    %v28 = vld [vmem:[%s1 + $0x60] sm:$0xff]
    %v29 = vld [vmem:[%s1 + $0x68] sm:$0xff]
    %v30 = vld [vmem:[%s2] sm:$0x1]
    %v31 = vld [vmem:[%s2 + $0x1] sm:$0x1]
    %v32 = vld [vmem:[%s2 + $0x2] sm:$0x1]
    %v33 = vld [vmem:[%s2 + $0x3] sm:$0x1]
    %v34 = vld [vmem:[%s2 + $0x4] sm:$0x1]
    %vm35 = vcmask 392192
    %v37 = vsel %vm35, %v15, 0
    %39 = vmatprep.subr.mxu0 0.0
    %40 = vmatpush1.msra.mxu0 %v16
    %41 = vmatprep.subr.mxu0 0.0
    %42 = vmatpush1.msra.mxu0 %v17
    %43 = vmatprep.subr.mxu0 0.0
    %44 = vmatpush1.msra.mxu0 %v18
    %45 = vmatprep.subr.mxu0 0.0
    %46 = vmatpush1.msra.mxu0 %v19
    %47 = vmatprep.subr.mxu0 0.0
    %48 = vmatpush1.msra.mxu0 %v20
    %49 = vmatprep.subr.mxu0 0.0
    %50 = vmatpush1.msra.mxu0 %v21
    %51 = vmatprep.subr.mxu0 0.0
    %52 = vmatpush1.msra.mxu0 0.0
    %53 = vmatprep.subr.mxu0 0.0
    %54 = vmatpush1.msra.mxu0 0.0
    %55 = vmatprep.subr.mxu0 0.0
    %56 = vmatpush1.msra.mxu0 0.0
    %57 = vmatprep.subr.mxu0 0.0
    %58 = vmatpush1.msra.mxu0 0.0
    %59 = vmatprep.subr.mxu0 0.0
    %60 = vmatpush1.msra.mxu0 0.0
    %61 = vmatprep.subr.mxu0 0.0
    %62 = vmatpush1.msra.mxu0 0.0
    %63 = vmatprep.subr.mxu0 0.0
    %64 = vmatpush1.msra.mxu0 0.0
    %65 = vmatprep.subr.mxu0 0.0
    %66 = vmatpush1.msra.mxu0 0.0
    %67 = vmatprep.subr.mxu0 0.0
    %68 = vmatpush1.msra.mxu0 0.0
    %69 = vmatprep.subr.mxu0 0.0
    %70 = vmatpush1.msra.mxu0 0.0
    %71 = vmatprep.subr.mxu0 0.0
    %72 = vmatpush1.msra.mxu0 0.0
    %73 = vmatprep.subr.mxu0 0.0
    %74 = vmatpush1.msra.mxu0 0.0
    %75 = vmatprep.subr.mxu0 0.0
    %76 = vmatpush1.msra.mxu0 0.0
    %77 = vmatprep.subr.mxu0 0.0
    %78 = vmatpush1.msra.mxu0 0.0
    %79 = vmatprep.subr.mxu0 0.0
    %80 = vmatpush1.msra.mxu0 0.0
    %81 = vmatprep.subr.mxu0 0.0
    %82 = vmatpush1.msra.mxu0 0.0
    %83 = vmatprep.subr.mxu0 0.0
    %84 = vmatpush1.msra.mxu0 0.0
    %85 = vmatprep.subr.mxu0 0.0
    %86 = vmatpush1.msra.mxu0 0.0
    %87 = vmatprep.subr.mxu0 0.0
    %88 = vmatpush1.msra.mxu0 0.0
    %89 = vmatprep.subr.mxu0 0.0
    %90 = vmatpush1.msra.mxu0 0.0
    %91 = vmatprep.subr.mxu0 0.0
    %92 = vmatpush1.msra.mxu0 0.0
    %93 = vmatprep.subr.mxu0 0.0
    %94 = vmatpush1.msra.mxu0 0.0
    %95 = vmatprep.subr.mxu0 0.0
    %96 = vmatpush1.msra.mxu0 0.0
    %97 = vmatprep.subr.mxu0 0.0
    %98 = vmatpush1.msra.mxu0 0.0
    %99 = vmatprep.subr.mxu0 0.0
    %100 = vmatpush1.msra.mxu0 0.0
    %101 = vmatprep.subr.mxu0 0.0
    %102 = vmatpush1.msra.mxu0 0.0
    %103 = vmatprep.mubr.f32.mxu0 0.0
    %104 = vmatmul.mubr.f32.gmra.mrb[0].mxu0 %v37
    %v105 = vpop.f32.mrb[0].mxu0
    %v106 = vadd.f32 0.0, %v105
    %v107 = vpop.f32.mrb[0].mxu0
    %108 = vdwg.mxu0
    %vm109 = vcmask 261120
    %v110 = vsel %vm109, %v106, 0.0
    %v111 = vrot.slane %v110, 4
    %v112 = vadd.f32 %v110, %v111
    %v113 = vrot.slane %v112, 2
    %v114 = vadd.f32 %v112, %v113
    %v115 = vrot.slane %v114, 1
    %v116 = vadd.f32 %v114, %v115
    %v117 = vrcp.pop 8.0
    %v118 = vmul.f32 %v116, %v117
    %v119 = vsub.f32 %v106, %v118
    %v120 = vmul.f32 %v119, %v119
    %v121 = vsel %vm109, %v120, 0.0
    %v122 = vrot.slane %v121, 4
    %v123 = vadd.f32 %v121, %v122
    %v124 = vrot.slane %v123, 2
    %v125 = vadd.f32 %v123, %v124
    %v126 = vrot.slane %v125, 1
    %v127 = vadd.f32 %v125, %v126
    %v128 = vmul.f32 %v127, %v117
    %v129 = vadd.f32 %v128, 1e-05
    %v130 = vrsqrt.pop %v129
    %v131 = vmul.f32 %v30, %v130
    %v132 = vmul.f32 %v118, %v131
    %v133 = vsub.f32 %v31, %v132
    %v134 = vlaneseq
    %v135 = vshrl.u32 %v134, 7
    %v136 = vsub.s32 0, %v135
    %v137 = vrot.slane %v131, %v136
    %v138 = vmul.f32 %v106, %v137
    %v139 = vlaneseq
    %v140 = vshrl.u32 %v139, 7
    %v141 = vsub.s32 0, %v140
    %v142 = vrot.slane %v133, %v141
    %v143 = vadd.f32 %v138, %v142
    %v144 = vtanh.pop %v143
    %v146 = vsel %vm109, %v144, 0
    %148 = vmatprep.subr.mxu0 0.0
    %149 = vmatpush1.msra.mxu0 %v22
    %150 = vmatprep.subr.mxu0 0.0
    %151 = vmatpush1.msra.mxu0 %v23
    %152 = vmatprep.subr.mxu0 0.0
    %153 = vmatpush1.msra.mxu0 %v24
    %154 = vmatprep.subr.mxu0 0.0
    %155 = vmatpush1.msra.mxu0 %v25
    %156 = vmatprep.subr.mxu0 0.0
    %157 = vmatpush1.msra.mxu0 0.0
    %158 = vmatprep.subr.mxu0 0.0
    %159 = vmatpush1.msra.mxu0 0.0
    %160 = vmatprep.subr.mxu0 0.0
    %161 = vmatpush1.msra.mxu0 0.0
    %162 = vmatprep.subr.mxu0 0.0
    %163 = vmatpush1.msra.mxu0 0.0
    %164 = vmatprep.subr.mxu0 0.0
    %165 = vmatpush1.msra.mxu0 0.0
    %166 = vmatprep.subr.mxu0 0.0
    %167 = vmatpush1.msra.mxu0 0.0
    %168 = vmatprep.subr.mxu0 0.0
    %169 = vmatpush1.msra.mxu0 0.0
    %170 = vmatprep.subr.mxu0 0.0
    %171 = vmatpush1.msra.mxu0 0.0
    %172 = vmatprep.subr.mxu0 0.0
    %173 = vmatpush1.msra.mxu0 0.0
    %174 = vmatprep.subr.mxu0 0.0
    %175 = vmatpush1.msra.mxu0 0.0
    %176 = vmatprep.subr.mxu0 0.0
    %177 = vmatpush1.msra.mxu0 0.0
    %178 = vmatprep.subr.mxu0 0.0
    %179 = vmatpush1.msra.mxu0 0.0
    %180 = vmatprep.subr.mxu0 0.0
    %181 = vmatpush1.msra.mxu0 0.0
    %182 = vmatprep.subr.mxu0 0.0
    %183 = vmatpush1.msra.mxu0 0.0
    %184 = vmatprep.subr.mxu0 0.0
    %185 = vmatpush1.msra.mxu0 0.0
    %186 = vmatprep.subr.mxu0 0.0
    %187 = vmatpush1.msra.mxu0 0.0
    %188 = vmatprep.subr.mxu0 0.0
    %189 = vmatpush1.msra.mxu0 0.0
    %190 = vmatprep.subr.mxu0 0.0
    %191 = vmatpush1.msra.mxu0 0.0
    %192 = vmatprep.subr.mxu0 0.0
    %193 = vmatpush1.msra.mxu0 0.0
    %194 = vmatprep.subr.mxu0 0.0
    %195 = vmatpush1.msra.mxu0 0.0
    %196 = vmatprep.subr.mxu0 0.0
    %197 = vmatpush1.msra.mxu0 0.0
    %198 = vmatprep.subr.mxu0 0.0
    %199 = vmatpush1.msra.mxu0 0.0
    %200 = vmatprep.subr.mxu0 0.0
    %201 = vmatpush1.msra.mxu0 0.0
    %202 = vmatprep.subr.mxu0 0.0
    %203 = vmatpush1.msra.mxu0 0.0
    %204 = vmatprep.subr.mxu0 0.0
    %205 = vmatpush1.msra.mxu0 0.0
    %206 = vmatprep.subr.mxu0 0.0
    %207 = vmatpush1.msra.mxu0 0.0
    %208 = vmatprep.subr.mxu0 0.0
    %209 = vmatpush1.msra.mxu0 0.0
    %210 = vmatprep.subr.mxu0 0.0
    %211 = vmatpush1.msra.mxu0 0.0
    %212 = vmatprep.mubr.f32.mxu0 0.0
    %213 = vmatmul.mubr.f32.gmra.mrb[0].mxu0 %v146
    %v214 = vpop.f32.mrb[0].mxu0
    %v215 = vadd.f32 0.0, %v214
    %v216 = vpop.f32.mrb[0].mxu0
    %217 = vdwg.mxu0
    %v218 = vsel %vm109, %v215, 0.0
    %v219 = vrot.slane %v218, 4
    %v220 = vadd.f32 %v218, %v219
    %v221 = vrot.slane %v220, 2
    %v222 = vadd.f32 %v220, %v221
    %v223 = vrot.slane %v222, 1
    %v224 = vadd.f32 %v222, %v223
    %v225 = vmul.f32 %v224, %v117
    %v226 = vsub.f32 %v215, %v225
    %v227 = vmul.f32 %v226, %v226
    %v228 = vsel %vm109, %v227, 0.0
    %v229 = vrot.slane %v228, 4
    %v230 = vadd.f32 %v228, %v229
    %v231 = vrot.slane %v230, 2
    %v232 = vadd.f32 %v230, %v231
    %v233 = vrot.slane %v232, 1
    %v234 = vadd.f32 %v232, %v233
    %v235 = vmul.f32 %v234, %v117
    %v236 = vadd.f32 %v235, 1e-05
    %v237 = vrsqrt.pop %v236
    %v238 = vmul.f32 %v32, %v237
    %v239 = vmul.f32 %v225, %v238
    %v240 = vsub.f32 %v33, %v239
    %v241 = vlaneseq
    %v242 = vshrl.u32 %v241, 7
    %v243 = vsub.s32 0, %v242
    %v244 = vrot.slane %v238, %v243
    %v245 = vmul.f32 %v215, %v244
    %v246 = vlaneseq
    %v247 = vshrl.u32 %v246, 7
    %v248 = vsub.s32 0, %v247
    %v249 = vrot.slane %v240, %v248
    %v250 = vadd.f32 %v245, %v249
    %v251 = vtanh.pop %v250
    %v252 = vlaneseq
    %v253 = vshrl.u32 %v252, 7
    %v254 = vsub.s32 0, %v253
    %v255 = vrot.slane %v34, %v254
    %v257 = vsel %vm109, %v251, 0
    %259 = vmatprep.subr.mxu0 0.0
    %260 = vmatpush1.msra.mxu0 %v26
    %261 = vmatprep.subr.mxu0 0.0
    %262 = vmatpush1.msra.mxu0 %v27
    %263 = vmatprep.subr.mxu0 0.0
    %264 = vmatpush1.msra.mxu0 %v28
    %265 = vmatprep.subr.mxu0 0.0
    %266 = vmatpush1.msra.mxu0 %v29
    %267 = vmatprep.subr.mxu0 0.0
    %268 = vmatpush1.msra.mxu0 0.0
    %269 = vmatprep.subr.mxu0 0.0
    %270 = vmatpush1.msra.mxu0 0.0
    %271 = vmatprep.subr.mxu0 0.0
    %272 = vmatpush1.msra.mxu0 0.0
    %273 = vmatprep.subr.mxu0 0.0
    %274 = vmatpush1.msra.mxu0 0.0
    %275 = vmatprep.subr.mxu0 0.0
    %276 = vmatpush1.msra.mxu0 0.0
    %277 = vmatprep.subr.mxu0 0.0
    %278 = vmatpush1.msra.mxu0 0.0
    %279 = vmatprep.subr.mxu0 0.0
    %280 = vmatpush1.msra.mxu0 0.0
    %281 = vmatprep.subr.mxu0 0.0
    %282 = vmatpush1.msra.mxu0 0.0
    %283 = vmatprep.subr.mxu0 0.0
    %284 = vmatpush1.msra.mxu0 0.0
    %285 = vmatprep.subr.mxu0 0.0
    %286 = vmatpush1.msra.mxu0 0.0
    %287 = vmatprep.subr.mxu0 0.0
    %288 = vmatpush1.msra.mxu0 0.0
    %289 = vmatprep.subr.mxu0 0.0
    %290 = vmatpush1.msra.mxu0 0.0
    %291 = vmatprep.subr.mxu0 0.0
    %292 = vmatpush1.msra.mxu0 0.0
    %293 = vmatprep.subr.mxu0 0.0
    %294 = vmatpush1.msra.mxu0 0.0
    %295 = vmatprep.subr.mxu0 0.0
    %296 = vmatpush1.msra.mxu0 0.0
    %297 = vmatprep.subr.mxu0 0.0
    %298 = vmatpush1.msra.mxu0 0.0
    %299 = vmatprep.subr.mxu0 0.0
    %300 = vmatpush1.msra.mxu0 0.0
    %301 = vmatprep.subr.mxu0 0.0
    %302 = vmatpush1.msra.mxu0 0.0
    %303 = vmatprep.subr.mxu0 0.0
    %304 = vmatpush1.msra.mxu0 0.0
    %305 = vmatprep.subr.mxu0 0.0
    %306 = vmatpush1.msra.mxu0 0.0
    %307 = vmatprep.subr.mxu0 0.0
    %308 = vmatpush1.msra.mxu0 0.0
    %309 = vmatprep.subr.mxu0 0.0
    %310 = vmatpush1.msra.mxu0 0.0
    %311 = vmatprep.subr.mxu0 0.0
    %312 = vmatpush1.msra.mxu0 0.0
    %313 = vmatprep.subr.mxu0 0.0
    %314 = vmatpush1.msra.mxu0 0.0
    %315 = vmatprep.subr.mxu0 0.0
    %316 = vmatpush1.msra.mxu0 0.0
    %317 = vmatprep.subr.mxu0 0.0
    %318 = vmatpush1.msra.mxu0 0.0
    %319 = vmatprep.subr.mxu0 0.0
    %320 = vmatpush1.msra.mxu0 0.0
    %321 = vmatprep.subr.mxu0 0.0
    %322 = vmatpush1.msra.mxu0 0.0
    %323 = vmatprep.mubr.f32.mxu0 0.0
    %324 = vmatmul.mubr.f32.gmra.mrb[0].mxu0 %v257
    %v325 = vpop.f32.mrb[0].mxu0
    %v326 = vadd.f32 %v255, %v325
    %v327 = vpop.f32.mrb[0].mxu0
    %328 = vdwg.mxu0
    %vm329 = vcmask 523264
    %330 = vst.msk [vmem:[#allocation2] sm:$0xff] %vm329, %v326
    // Predicated region
    $region14: #{tpu_custom_call.1} parent=1 // pred_check
      _
    $region15: #{tpu_custom_call.1} parent=1 // pred_check_branch
      %332 = sbr.rel (0) target = $region17
    $region16: #{tpu_custom_call.1} parent=1 // pred_region
      %s334 = ssub.s32 128, 128
      %335 = vsyncadd [#allocation3], %s334
      %s337 = sshll.u32 [#allocation2], 4
      %s338 = int_to_ptr.vmem [resolvable:$true] %s337
      %340 = dma.vmem_to_hbm [thread:$0]  %s338, 128, %s3, [#allocation3]
    $region17: #{tpu_custom_call.1} parent=1 // pred_fallthru
      _
    // Predicated region
    $region18: #{tpu_custom_call.1} parent=1 // pred_check
      _
    $region19: #{tpu_custom_call.1} parent=1 // pred_check_branch
      %342 = sbr.rel (0) target = $region21
    $region20: #{tpu_custom_call.1} parent=1 // pred_region
      %343 = dma.done [#allocation3], 128
    $region21: #{tpu_custom_call.1} parent=1 // pred_fallthru
      _
    %344 = vsyncpa [#allocation3], 1

</llo_original>
